<compile_context>
chip_gen: v5e
topology: v5e:2x2
jax: 0.10.0
libtpu: 0.0.40
codegen_flags: <defaults>
</compile_context>

<pallas_src>
import math

import jax
import jax.numpy as jnp
from jax.experimental import pallas as pl
from jax.experimental.pallas import tpu as pltpu


def _nacl_kernel(param_ref, out_ref):
    # param_ref: (1, L) VMEM tile, resident across grid steps (constant index_map).
    # out_ref:   (tile_rows, L) VMEM tile.
    # The kernel is store-bound; the VPU broadcast is free filler under the
    # output writeback DMA.
    out_ref[...] = jnp.broadcast_to(param_ref[...], out_ref.shape)


def nacl_forward(psudo_ctxvector, queryvector, yi=None, *,
                 min_pallas_bytes=512 * 1024,
                 vmem_budget_bytes=8 * 1024 * 1024):
    """Pallas implementation of NACL.forward.

    psudo_ctxvector: [dim] parameter.
    queryvector:     [..., q_dim] — only its leading shape is used.
    yi:              ignored (kept for API parity with the torch module).
    Returns:         queryvector.shape[:-1] + [dim], dtype of the parameter.
    """
    dim = int(psudo_ctxvector.shape[0])
    lead_shape = tuple(int(s) for s in queryvector.shape[:-1])
    out_shape = lead_shape + (dim,)
    dtype = psudo_ctxvector.dtype
    itemsize = jnp.dtype(dtype).itemsize

    rows = 1
    for s in lead_shape:
        rows *= s

    total_bytes = rows * dim * itemsize
    if rows == 0 or dim == 0 or total_bytes < min_pallas_bytes:
        # Degenerate / tiny outputs: a Pallas launch (custom call + pipeline
        # prologue) costs far more than the broadcast; let XLA fuse it.
        return jnp.broadcast_to(psudo_ctxvector, out_shape)

    # --- Lane-dense packing: make the emitted last dim a multiple of 128. ---
    g = math.gcd(dim, 128)
    L = dim * (128 // g)            # lcm(dim, 128)
    row_group = L // dim            # logical rows packed into one lane-dense row

    rows_pad = -(-rows // row_group) * row_group
    packed_rows = rows_pad // row_group

    # Param slab covering one packed row; tiled once in the wrapper.
    param_slab = jnp.tile(psudo_ctxvector, row_group).reshape(1, L)

    # --- Row-tile sizing from a VMEM byte budget (per output buffer). ---
    if packed_rows <= 8:
        tile_rows = packed_rows                       # full-extent block is legal
    else:
        budget_rows = max(8, (vmem_budget_bytes // (L * itemsize)) // 8 * 8)
        half = -(-packed_rows // 2)                   # cdiv(packed_rows, 2)
        half_rows = -(-half // 8) * 8                 # -> at least 2 grid steps
        tile_rows = min(budget_rows, half_rows)
    grid = (pl.cdiv(packed_rows, tile_rows),)

    out_packed = pl.pallas_call(
        _nacl_kernel,
        out_shape=jax.ShapeDtypeStruct((packed_rows, L), dtype),
        grid=grid,
        in_specs=[pl.BlockSpec((1, L), lambda i: (0, 0))],
        out_specs=pl.BlockSpec((tile_rows, L), lambda i: (i, 0)),
        compiler_params=pltpu.CompilerParams(
            dimension_semantics=("parallel",),
            vmem_limit_bytes=32 * 1024 * 1024,
        ),
    )(param_slab)

    out2d = out_packed.reshape(rows_pad, dim)
    if rows_pad != rows:
        out2d = out2d[:rows]
    return out2d.reshape(out_shape)


if __name__ == "__main__":
    key = jax.random.PRNGKey(0)
    k_param, k_q, k_p3, k_q2, k_q3 = jax.random.split(key, 5)

    # --- Case 1: module-sized tiny shapes -> pure-JAX fast path. ---
    B, T, H = 2, 8, 32
    dim = 32  # ctx_size
    # The torch module initializes the parameter to zeros; use a non-zero init
    # so the broadcast path is actually exercised.
    param = jax.random.normal(k_param, (dim,), dtype=jnp.float32)
    query = jax.random.normal(k_q, (B, T, H), dtype=jnp.float32)
    yi = jnp.zeros((B, T), dtype=jnp.float32)  # unused, like the module
    out = jax.block_until_ready(nacl_forward(param, query, yi))
    ref = jnp.broadcast_to(param, (B, T, dim))
    assert out.shape == (B, T, dim), out.shape
    assert out.dtype == param.dtype
    assert jnp.array_equal(out, ref), "mismatch vs reference broadcast (tiny path)"

    # --- Case 2: Pallas path, dim < 128 -> lane-dense packed output (L=128). ---
    B2, T2 = 4, 2048
    query2 = jax.random.normal(k_q2, (B2, T2, H), dtype=jnp.float32)
    out2 = jax.block_until_ready(nacl_forward(param, query2, None))
    ref2 = jnp.broadcast_to(param, (B2, T2, dim))
    assert out2.shape == (B2, T2, dim), out2.shape
    assert jnp.array_equal(out2, ref2), "mismatch vs reference broadcast (packed path)"

    # --- Case 3: Pallas path with row padding (rows not a multiple of the
    #     packing group), forced onto the kernel via min_pallas_bytes=0. ---
    dim3 = 96            # lcm(96, 128) = 384 -> row_group = 4
    B3, T3 = 2, 341      # rows = 682, not a multiple of 4
    param3 = jax.random.normal(k_p3, (dim3,), dtype=jnp.float32)
    query3 = jax.random.normal(k_q3, (B3, T3, H), dtype=jnp.float32)
    out3 = jax.block_until_ready(
        nacl_forward(param3, query3, None, min_pallas_bytes=0))
    ref3 = jnp.broadcast_to(param3, (B3, T3, dim3))
    assert out3.shape == (B3, T3, dim3), out3.shape
    assert jnp.array_equal(out3, ref3), "mismatch vs reference broadcast (padded path)"

    print("KERNEL_OK")
</pallas_src>

<mosaic_0001>
module attributes {stable_mosaic.version = 11 : i64} {
  func.func @_nacl_kernel(%arg0: i32, %arg1: memref<1x128xf32, #tpu.memory_space<vmem>>, %arg2: memref<1024x128xf32, #tpu.memory_space<vmem>>) attributes {dimension_semantics = [#tpu.dimension_semantics<parallel>], iteration_bounds = array<i64: 2>, scalar_prefetch = 0 : i64, scratch_operands = 0 : i64, tpu.core_type = #tpu.core_type<tc>, window_params = [{pipeline_mode = #tpu.pipeline_mode<synchronous>, transform_indices = @transform_0, window_bounds = array<i64: 1, 128>}, {transform_indices = @transform_1, window_bounds = array<i64: 1024, 128>}]} {
    %c0 = arith.constant 0 : index
    %c0_0 = arith.constant 0 : index
    %0 = vector.load %arg1[%c0, %c0_0] : memref<1x128xf32, #tpu.memory_space<vmem>>, vector<1x128xf32>
    %1 = vector.shape_cast %0 : vector<1x128xf32> to vector<1x128xf32>
    %2 = vector.broadcast %1 : vector<1x128xf32> to vector<1024x128xf32>
    %c0_1 = arith.constant 0 : index
    %c0_2 = arith.constant 0 : index
    %3 = vector.load %arg2[%c0_1, %c0_2] : memref<1024x128xf32, #tpu.memory_space<vmem>>, vector<1024x128xf32>
    tpu.vector_store %arg2[%c0_1, %c0_2], %2 {strides = array<i32>} : memref<1024x128xf32, #tpu.memory_space<vmem>>, vector<1024x128xf32>,
    return
  }
  func.func @transform_0(%arg0: i32) -> (i32, i32) {
    %c0_i32 = arith.constant 0 : i32
    %c0_i32_0 = arith.constant 0 : i32
    %c0_i32_1 = arith.constant 0 : i32
    return %c0_i32, %c0_i32_0 : i32, i32
  }
  func.func @transform_1(%arg0: i32) -> (i32, i32) {
    %c0_i32 = arith.constant 0 : i32
    %c0_i32_0 = arith.constant 0 : i32
    return %arg0, %c0_i32 : i32, i32
  }
}

</mosaic_0001>

<llo_original>
// kernel: tpu_custom_call.1
$region0: #{tpu_custom_call.1}
  #allocation0 [shape = 'u32[]', space=smem, size = 0x4, offset = 0x4, fixed_abs, tag = 'smem constant byte address 0x4 - core index']
  #allocation1 [shape = 'u32[72,128]{1,0:T(1,128)}', space=vmem, size = 0x9000, scoped, tag = 'internal scratch']
  %s0 = inlined_call_operand.hbm [shape: f32[1,128], index: 0, kind: input, shape index: {}]
  %s1 = inlined_call_operand.hbm [shape: f32[2048,128], index: 1, kind: output, shape index: {}]
  %s2 = sld [smem:[#allocation0]]
  $region41: #{tpu_custom_call.1} parent=0
    _
  %s4 = ssub.s32 1, %s2
  %s5 = scalar_select 0, %s4, %s2
  $region1: #{tpu_custom_call.1} parent=0
    #allocation2 [shape = 'u8[512]{0}', space=vmem, size = 0x400, scoped, tag = 'input window, operand 0, single buffered']
    #allocation3 [shape = 's32[2]{0}', space=sflag, size = 0x8, scoped, tag = 'scoped memory for tpu_custom_call.1']
    #allocation4 [shape = 's32[2]{0}', space=sflag, size = 0x8, scoped, tag = 'scoped memory for tpu_custom_call.1']
    #allocation5 [shape = 'u8[1048576]{0}', space=vmem, size = 0x100000, scoped, tag = 'output window, operand 0']
    %6 = vsyncpa [#allocation3], 0
    %7 = vsyncpa [#allocation4], 0
    %s8 = scalar_lea.sflag [#allocation4], 1
    %9 = vsyncpa %s8, 0
    loop: start=0, step=1, limit=4
    $region2: #{tpu_custom_call.1} parent=1 // loop_pre_header
      _
    $region3: #{tpu_custom_call.1} parent=1 // loop_header
      %s11 = sphi 0, %s15
      %p12 = scmp.ge.s32.totalorder %s11, 4
      %s19 = sphi 0, %s19
      %s21 = sphi 0, %s19
      %s22 = sphi 0, %s21
      %s36 = sphi 0, %s22
      %s42 = sphi 0, %s44
      %s45 = sphi 0, %s42
      %s46 = sphi 0, %s45
      %s62 = sphi 0, %s46
    $region4: #{tpu_custom_call.1} parent=1 // loop_header_branch
      %14 = sbr.rel (%p12) target = $region8
    $region5: #{tpu_custom_call.1} parent=1 // loop_body
      %s16 = ssub.s32 %s11, 1
      %s17 = ssub.s32 %s11, 2
      %s18 = sadd.s32 %s11, 1
      %s20 = sadd.s32 %s19, 1
      %p23 = scmp.eq.s32.totalorder %s11, 1
      %p24 = scmp.ne.s32.totalorder %s19, %s21
      %p25 = scmp.eq.s32.totalorder %s11, 0
      %p26 = por %p24, %p25
      %p27 = scmp.ne.s32.totalorder %s19, %s21
      %p28 = scmp.eq.s32.totalorder %s16, 1
      %p29 = por %p27, %p28
      %p30 = scmp.ne.s32.totalorder %s21, %s22
      %p31 = scmp.eq.s32.totalorder %s16, 0
      %p32 = por %p30, %p31
      %p33 = scmp.ne.s32.totalorder %s21, %s22
      %p34 = scmp.eq.s32.totalorder %s17, 1
      %p35 = por %p33, %p34
      %p37 = scmp.ne.s32.totalorder %s22, %s36
      %p38 = scmp.eq.s32.totalorder %s17, 0
      %p39 = por %p37, %p38
      %s40 = ssub.s32 %s11, %s18
      %p41 = scmp.eq.s32.totalorder %s40, 0
      %s43 = sadd.s32 %s42, 1
      %s44 = scalar_select %p41, %s42, %s43
      %p47 = pneg %p41
      %p48 = scmp.eq.s32.totalorder %s11, 1
      %p49 = por %p47, %p48
      %p50 = scmp.ne.s32.totalorder %s42, %s45
      %p51 = scmp.eq.s32.totalorder %s11, 0
      %p52 = por %p50, %p51
      %p53 = scmp.ne.s32.totalorder %s42, %s45
      %p54 = scmp.eq.s32.totalorder %s16, 1
      %p55 = por %p53, %p54
      %p56 = scmp.ne.s32.totalorder %s45, %s46
      %p57 = scmp.eq.s32.totalorder %s16, 0
      %p58 = por %p56, %p57
      %p59 = scmp.ne.s32.totalorder %s45, %s46
      %p60 = scmp.eq.s32.totalorder %s17, 1
      %p61 = por %p59, %p60
      %p63 = scmp.ne.s32.totalorder %s46, %s62
      %p64 = scmp.eq.s32.totalorder %s17, 0
      %p65 = por %p63, %p64
      %p66 = scmp.le.s32.totalorder 1, %s11
      %p67 = scmp.lt.s32.totalorder %s11, 3
      %p68 = pnand %p66, %p67
      %p69 = pneg %p68
      // Predicated region
      $region9: #{tpu_custom_call.1} parent=5 // pred_check
        _
      $region10: #{tpu_custom_call.1} parent=5 // pred_check_branch
        %71 = sbr.rel (%p68) target = $region12
      $region11: #{tpu_custom_call.1} parent=5 // pred_region
        %s72 = ssub.s32 %s11, 1
        // Predicated region
        $region13: #{tpu_custom_call.1} parent=11 // pred_check
          %p73 = pneg %p32
        $region14: #{tpu_custom_call.1} parent=11 // pred_check_branch
          %75 = sbr.rel (%p73) target = $region16
        $region15: #{tpu_custom_call.1} parent=11 // pred_region
          %77 = vsyncadd [#allocation3], 0
          %s79 = sshll.u32 %s0, 4
          %s80 = int_to_ptr.hbm [resolvable:$true] %s79
          %s81 = sshll.u32 [#allocation2], 4
          %s82 = int_to_ptr.vmem [resolvable:$true] %s81
          %84 = dma.hbm_to_vmem [thread:$0]  %s80, 16, %s82, [#allocation3]
        $region16: #{tpu_custom_call.1} parent=11 // pred_fallthru
          _
      $region12: #{tpu_custom_call.1} parent=5 // pred_fallthru
        _
      %p85 = scmp.lt.s32.totalorder %s11, 2
      // Predicated region
      $region17: #{tpu_custom_call.1} parent=5 // pred_check
        %p86 = pneg %p85
      $region18: #{tpu_custom_call.1} parent=5 // pred_check_branch
        %88 = sbr.rel (%p86) target = $region20
      $region19: #{tpu_custom_call.1} parent=5 // pred_region
        _
      $region20: #{tpu_custom_call.1} parent=5 // pred_fallthru
        _
      %p89 = scmp.le.s32.totalorder 1, %s11
      %p90 = scmp.lt.s32.totalorder %s11, 3
      %p91 = pnand %p89, %p90
      %p92 = pneg %p91
      // Predicated region
      $region21: #{tpu_custom_call.1} parent=5 // pred_check
        _
      $region22: #{tpu_custom_call.1} parent=5 // pred_check_branch
        %94 = sbr.rel (%p91) target = $region24
      $region23: #{tpu_custom_call.1} parent=5 // pred_region
        %s95 = ssub.s32 %s11, 1
        // Predicated region
        $region25: #{tpu_custom_call.1} parent=23 // pred_check
          %p96 = pneg %p32
        $region26: #{tpu_custom_call.1} parent=23 // pred_check_branch
          %98 = sbr.rel (%p96) target = $region28
        $region27: #{tpu_custom_call.1} parent=23 // pred_region
          %100 = dma.done [#allocation3], 16
        $region28: #{tpu_custom_call.1} parent=23 // pred_fallthru
          _
        %p101 = pneg %p32
        %p102 = pneg %p29
        %p103 = pneg %p58
        %p104 = pneg %p55
        %s105 = sand.u32 %s45, 1
        %s106 = scalar_lea.sflag [#allocation4], %s105
        %s107 = sand.u32 %s45, 1
        %s108 = smul.addr %s107, 1024
        %s109 = scalar_lea.vmem [#allocation5], %s108
        %s110 = smul.u32 128, %s16
        %v111 = vld [vmem:[#allocation2] sm:$0x1]
        %v113 = vperm.slane %v111, 0
        %115 = vst [vmem:[%s109] sm:$0xff] %v113
        %116 = vst [vmem:[%s109 + $0x8] sm:$0xff] %v113
        %117 = vst [vmem:[%s109 + $0x10] sm:$0xff] %v113
        %118 = vst [vmem:[%s109 + $0x18] sm:$0xff] %v113
        %119 = vst [vmem:[%s109 + $0x20] sm:$0xff] %v113
        %120 = vst [vmem:[%s109 + $0x28] sm:$0xff] %v113
        %121 = vst [vmem:[%s109 + $0x30] sm:$0xff] %v113
        %122 = vst [vmem:[%s109 + $0x38] sm:$0xff] %v113
        %123 = vst [vmem:[%s109 + $0x40] sm:$0xff] %v113
        %124 = vst [vmem:[%s109 + $0x48] sm:$0xff] %v113
        %125 = vst [vmem:[%s109 + $0x50] sm:$0xff] %v113
        %126 = vst [vmem:[%s109 + $0x58] sm:$0xff] %v113
        %127 = vst [vmem:[%s109 + $0x60] sm:$0xff] %v113
        %128 = vst [vmem:[%s109 + $0x68] sm:$0xff] %v113
        %129 = vst [vmem:[%s109 + $0x70] sm:$0xff] %v113
        %130 = vst [vmem:[%s109 + $0x78] sm:$0xff] %v113
        %131 = vst [vmem:[%s109 + $0x80] sm:$0xff] %v113
        %132 = vst [vmem:[%s109 + $0x88] sm:$0xff] %v113
        %133 = vst [vmem:[%s109 + $0x90] sm:$0xff] %v113
        %134 = vst [vmem:[%s109 + $0x98] sm:$0xff] %v113
        %135 = vst [vmem:[%s109 + $0xa0] sm:$0xff] %v113
        %136 = vst [vmem:[%s109 + $0xa8] sm:$0xff] %v113
        %137 = vst [vmem:[%s109 + $0xb0] sm:$0xff] %v113
        %138 = vst [vmem:[%s109 + $0xb8] sm:$0xff] %v113
        %139 = vst [vmem:[%s109 + $0xc0] sm:$0xff] %v113
        %140 = vst [vmem:[%s109 + $0xc8] sm:$0xff] %v113
        %141 = vst [vmem:[%s109 + $0xd0] sm:$0xff] %v113
        %142 = vst [vmem:[%s109 + $0xd8] sm:$0xff] %v113
        %143 = vst [vmem:[%s109 + $0xe0] sm:$0xff] %v113
        %144 = vst [vmem:[%s109 + $0xe8] sm:$0xff] %v113
        %145 = vst [vmem:[%s109 + $0xf0] sm:$0xff] %v113
        %146 = vst [vmem:[%s109 + $0xf8] sm:$0xff] %v113
        %147 = vst [vmem:[%s109 + $0x100] sm:$0xff] %v113
        %148 = vst [vmem:[%s109 + $0x108] sm:$0xff] %v113
        %149 = vst [vmem:[%s109 + $0x110] sm:$0xff] %v113
        %150 = vst [vmem:[%s109 + $0x118] sm:$0xff] %v113
        %151 = vst [vmem:[%s109 + $0x120] sm:$0xff] %v113
        %152 = vst [vmem:[%s109 + $0x128] sm:$0xff] %v113
        %153 = vst [vmem:[%s109 + $0x130] sm:$0xff] %v113
        %154 = vst [vmem:[%s109 + $0x138] sm:$0xff] %v113
        %155 = vst [vmem:[%s109 + $0x140] sm:$0xff] %v113
        %156 = vst [vmem:[%s109 + $0x148] sm:$0xff] %v113
        %157 = vst [vmem:[%s109 + $0x150] sm:$0xff] %v113
        %158 = vst [vmem:[%s109 + $0x158] sm:$0xff] %v113
        %159 = vst [vmem:[%s109 + $0x160] sm:$0xff] %v113
        %160 = vst [vmem:[%s109 + $0x168] sm:$0xff] %v113
        %161 = vst [vmem:[%s109 + $0x170] sm:$0xff] %v113
        %162 = vst [vmem:[%s109 + $0x178] sm:$0xff] %v113
        %163 = vst [vmem:[%s109 + $0x180] sm:$0xff] %v113
        %164 = vst [vmem:[%s109 + $0x188] sm:$0xff] %v113
        %165 = vst [vmem:[%s109 + $0x190] sm:$0xff] %v113
        %166 = vst [vmem:[%s109 + $0x198] sm:$0xff] %v113
        %167 = vst [vmem:[%s109 + $0x1a0] sm:$0xff] %v113
        %168 = vst [vmem:[%s109 + $0x1a8] sm:$0xff] %v113
        %169 = vst [vmem:[%s109 + $0x1b0] sm:$0xff] %v113
        %170 = vst [vmem:[%s109 + $0x1b8] sm:$0xff] %v113
        %171 = vst [vmem:[%s109 + $0x1c0] sm:$0xff] %v113
        %172 = vst [vmem:[%s109 + $0x1c8] sm:$0xff] %v113
        %173 = vst [vmem:[%s109 + $0x1d0] sm:$0xff] %v113
        %174 = vst [vmem:[%s109 + $0x1d8] sm:$0xff] %v113
        %175 = vst [vmem:[%s109 + $0x1e0] sm:$0xff] %v113
        %176 = vst [vmem:[%s109 + $0x1e8] sm:$0xff] %v113
        %177 = vst [vmem:[%s109 + $0x1f0] sm:$0xff] %v113
        %178 = vst [vmem:[%s109 + $0x1f8] sm:$0xff] %v113
        %179 = vst [vmem:[%s109 + $0x200] sm:$0xff] %v113
        %180 = vst [vmem:[%s109 + $0x208] sm:$0xff] %v113
        %181 = vst [vmem:[%s109 + $0x210] sm:$0xff] %v113
        %182 = vst [vmem:[%s109 + $0x218] sm:$0xff] %v113
        %183 = vst [vmem:[%s109 + $0x220] sm:$0xff] %v113
        %184 = vst [vmem:[%s109 + $0x228] sm:$0xff] %v113
        %185 = vst [vmem:[%s109 + $0x230] sm:$0xff] %v113
        %186 = vst [vmem:[%s109 + $0x238] sm:$0xff] %v113
        %187 = vst [vmem:[%s109 + $0x240] sm:$0xff] %v113
        %188 = vst [vmem:[%s109 + $0x248] sm:$0xff] %v113
        %189 = vst [vmem:[%s109 + $0x250] sm:$0xff] %v113
        %190 = vst [vmem:[%s109 + $0x258] sm:$0xff] %v113
        %191 = vst [vmem:[%s109 + $0x260] sm:$0xff] %v113
        %192 = vst [vmem:[%s109 + $0x268] sm:$0xff] %v113
        %193 = vst [vmem:[%s109 + $0x270] sm:$0xff] %v113
        %194 = vst [vmem:[%s109 + $0x278] sm:$0xff] %v113
        %195 = vst [vmem:[%s109 + $0x280] sm:$0xff] %v113
        %196 = vst [vmem:[%s109 + $0x288] sm:$0xff] %v113
        %197 = vst [vmem:[%s109 + $0x290] sm:$0xff] %v113
        %198 = vst [vmem:[%s109 + $0x298] sm:$0xff] %v113
        %199 = vst [vmem:[%s109 + $0x2a0] sm:$0xff] %v113
        %200 = vst [vmem:[%s109 + $0x2a8] sm:$0xff] %v113
        %201 = vst [vmem:[%s109 + $0x2b0] sm:$0xff] %v113
        %202 = vst [vmem:[%s109 + $0x2b8] sm:$0xff] %v113
        %203 = vst [vmem:[%s109 + $0x2c0] sm:$0xff] %v113
        %204 = vst [vmem:[%s109 + $0x2c8] sm:$0xff] %v113
        %205 = vst [vmem:[%s109 + $0x2d0] sm:$0xff] %v113
        %206 = vst [vmem:[%s109 + $0x2d8] sm:$0xff] %v113
        %207 = vst [vmem:[%s109 + $0x2e0] sm:$0xff] %v113
        %208 = vst [vmem:[%s109 + $0x2e8] sm:$0xff] %v113
        %209 = vst [vmem:[%s109 + $0x2f0] sm:$0xff] %v113
        %210 = vst [vmem:[%s109 + $0x2f8] sm:$0xff] %v113
        %211 = vst [vmem:[%s109 + $0x300] sm:$0xff] %v113
        %212 = vst [vmem:[%s109 + $0x308] sm:$0xff] %v113
        %213 = vst [vmem:[%s109 + $0x310] sm:$0xff] %v113
        %214 = vst [vmem:[%s109 + $0x318] sm:$0xff] %v113
        %215 = vst [vmem:[%s109 + $0x320] sm:$0xff] %v113
        %216 = vst [vmem:[%s109 + $0x328] sm:$0xff] %v113
        %217 = vst [vmem:[%s109 + $0x330] sm:$0xff] %v113
        %218 = vst [vmem:[%s109 + $0x338] sm:$0xff] %v113
        %219 = vst [vmem:[%s109 + $0x340] sm:$0xff] %v113
        %220 = vst [vmem:[%s109 + $0x348] sm:$0xff] %v113
        %221 = vst [vmem:[%s109 + $0x350] sm:$0xff] %v113
        %222 = vst [vmem:[%s109 + $0x358] sm:$0xff] %v113
        %223 = vst [vmem:[%s109 + $0x360] sm:$0xff] %v113
        %224 = vst [vmem:[%s109 + $0x368] sm:$0xff] %v113
        %225 = vst [vmem:[%s109 + $0x370] sm:$0xff] %v113
        %226 = vst [vmem:[%s109 + $0x378] sm:$0xff] %v113
        %227 = vst [vmem:[%s109 + $0x380] sm:$0xff] %v113
        %228 = vst [vmem:[%s109 + $0x388] sm:$0xff] %v113
        %229 = vst [vmem:[%s109 + $0x390] sm:$0xff] %v113
        %230 = vst [vmem:[%s109 + $0x398] sm:$0xff] %v113
        %231 = vst [vmem:[%s109 + $0x3a0] sm:$0xff] %v113
        %232 = vst [vmem:[%s109 + $0x3a8] sm:$0xff] %v113
        %233 = vst [vmem:[%s109 + $0x3b0] sm:$0xff] %v113
        %234 = vst [vmem:[%s109 + $0x3b8] sm:$0xff] %v113
        %235 = vst [vmem:[%s109 + $0x3c0] sm:$0xff] %v113
        %236 = vst [vmem:[%s109 + $0x3c8] sm:$0xff] %v113
        %237 = vst [vmem:[%s109 + $0x3d0] sm:$0xff] %v113
        %238 = vst [vmem:[%s109 + $0x3d8] sm:$0xff] %v113
        %239 = vst [vmem:[%s109 + $0x3e0] sm:$0xff] %v113
        %240 = vst [vmem:[%s109 + $0x3e8] sm:$0xff] %v113
        %241 = vst [vmem:[%s109 + $0x3f0] sm:$0xff] %v113
        %242 = vst [vmem:[%s109 + $0x3f8] sm:$0xff] %v113
        %s243 = sand.u32 %s45, 1
        %s244 = scalar_lea.sflag [#allocation4], %s243
        %s245 = sand.u32 %s45, 1
        %s246 = smul.addr %s245, 1024
        %s247 = scalar_lea.vmem [#allocation5], %s246
        // Predicated region
        $region29: #{tpu_custom_call.1} parent=23 // pred_check
          %p248 = pneg %p55
        $region30: #{tpu_custom_call.1} parent=23 // pred_check_branch
          %250 = sbr.rel (%p248) target = $region32
        $region31: #{tpu_custom_call.1} parent=23 // pred_region
          %s251 = smul.u32 128, %s16
          %253 = vsyncadd %s244, 0
          %s254 = smul.addr %s251, 8
          %s255 = scalar_lea.hbm %s1, %s254
          %s256 = sshll.u32 %s247, 4
          %s257 = int_to_ptr.vmem [resolvable:$true] %s256
          %s258 = sshll.u32 %s255, 4
          %s259 = int_to_ptr.hbm [resolvable:$true] %s258
          %264 = dma.vmem_to_hbm [thread:$0]  %s257, 16384, %s259, %s244, 128, 128, 8
        $region32: #{tpu_custom_call.1} parent=23 // pred_fallthru
          _
      $region24: #{tpu_custom_call.1} parent=5 // pred_fallthru
        _
      %p265 = scmp.le.s32.totalorder 2, %s11
      // Predicated region
      $region33: #{tpu_custom_call.1} parent=5 // pred_check
        %p266 = pneg %p265
      $region34: #{tpu_custom_call.1} parent=5 // pred_check_branch
        %268 = sbr.rel (%p266) target = $region36
      $region35: #{tpu_custom_call.1} parent=5 // pred_region
        %s269 = ssub.s32 %s11, 2
        // Predicated region
        $region37: #{tpu_custom_call.1} parent=35 // pred_check
          %p270 = pneg %p61
        $region38: #{tpu_custom_call.1} parent=35 // pred_check_branch
          %272 = sbr.rel (%p270) target = $region40
        $region39: #{tpu_custom_call.1} parent=35 // pred_region
          %s273 = sand.u32 %s46, 1
          %s274 = scalar_lea.sflag [#allocation4], %s273
          %s275 = sand.u32 %s46, 1
          %s276 = smul.addr %s275, 1024
          %s277 = scalar_lea.vmem [#allocation5], %s276
          %279 = dma.done %s274, 16384
        $region40: #{tpu_custom_call.1} parent=35 // pred_fallthru
          _
      $region36: #{tpu_custom_call.1} parent=5 // pred_fallthru
        _
    $region6: #{tpu_custom_call.1} parent=1 // loop_footer
      %s15 = sadd.s32 1, %s11
    $region7: #{tpu_custom_call.1} parent=1 // loop_footer_branch
      %10 = sbr.rel target = $region3
    $region8: #{tpu_custom_call.1} parent=1 // loop_exit
      _
    %280 = vsyncpa [#allocation3], 1
    %s281 = scalar_lea.sflag [#allocation3], 1
    %282 = vsyncpa %s281, 1
    %283 = vsyncpa [#allocation4], 1
    %s284 = scalar_lea.sflag [#allocation4], 1
    %285 = vsyncpa %s284, 1

</llo_original>
